<compile_context>
chip_gen: v6e
topology: v6e:2x2x1
jax: 0.10.0
libtpu: 0.0.40
codegen_flags: <defaults>
</compile_context>

<pallas_src>
import functools

import jax
import jax.numpy as jnp
from jax import lax
from jax.experimental import pallas as pl
from jax.experimental.pallas import tpu as pltpu


_LANE = 128          # TPU lane width
_FEAT = 25           # input feature dim of the module
_DEFAULT_TB = 32768  # default batch-tile rows (3.1 MiB/tile of x)
_MAX_TB = 65536      # cap so double-buffered tiles stay well inside VMEM


def _round_up(v, m):
    return (v + m - 1) // m * m


def search_toy_kernel(wcat_ref, wcomb_ref, bias_ref, x_ref, ot_ref):
    # wcat_ref : VMEM (4, 25)  = [W3 ; W2 zero-padded to 25 cols]   (resident)
    # wcomb_ref: VMEM (2, 4)   = [alpha2*Wsm | alpha1*Wsm]          (resident)
    # bias_ref : VMEM (2, 1)   = alpha0 * (Wsm @ model1)            (resident)
    # x_ref    : VMEM (tb, 25) natural-layout batch tile (pipelined DMA)
    # ot_ref   : VMEM (2, tb)  lane-dense logits^T tile

    # Stage 1: both tanh branches in ONE skinny transposed-RHS MXU matmul.
    #   h[j, b] = sum_f wcat[j, f] * x[b, f]   -> (4, tb), batch on lanes.
    #   rows 0:2 of h = r3^T,  rows 2:4 of h = r2^T   (single tanh, few EUP pushes)
    h = jnp.tanh(
        lax.dot_general(
            wcat_ref[...], x_ref[...],
            dimension_numbers=(((1,), (1,)), ((), ())),   # contract feature dims
            preferred_element_type=jnp.float32,
        )
    )

    # Stage 2: folded (2, 4) mixing matrix as VPU broadcast-FMAs, then a single
    # unmasked lane-dense (2, tb) store.
    wcomb = wcomb_ref[...]
    ot_ref[...] = (
        wcomb[:, 0:1] * h[0:1, :]
        + wcomb[:, 1:2] * h[1:2, :]
        + wcomb[:, 2:3] * h[2:3, :]
        + wcomb[:, 3:4] * h[3:4, :]
        + bias_ref[...]
    )


@functools.partial(jax.jit, static_argnames=("tb",))
def search_toy_forward(x, alpha, params, *, tb=_DEFAULT_TB):
    """x: (B, 25) f32, alpha: (3,) f32, params dict -> logits (B, 2) f32."""
    B, F = x.shape
    assert F == _FEAT

    w2 = params["w2"]        # (2, 1)
    w3 = params["w3"]        # (2, 25)
    wsm = params["wsm"]      # (2, 2)
    m1 = params["model1"]    # (2,)

    # --- fold alpha / model1 / the final 2x2 Linear into tiny constants ---
    w2_pad = jnp.pad(w2, ((0, 0), (0, F - 1)))                           # (2, 25)
    wcat = jnp.concatenate([w3, w2_pad], axis=0).astype(jnp.float32)     # (4, 25)
    wcomb = jnp.concatenate([alpha[2] * wsm, alpha[1] * wsm], axis=1)    # (2, 4)
    wcomb = wcomb.astype(jnp.float32)
    bias = (alpha[0] * (wsm @ m1)).astype(jnp.float32).reshape(2, 1)     # (2, 1)

    # --- tile selection ---------------------------------------------------
    tb = _round_up(max(int(tb), 1), _LANE)      # lane rule: multiple of 128
    tb = min(tb, _MAX_TB)                       # VMEM guard (v5e/v7x)
    b128 = _round_up(B, _LANE)
    if b128 >= 4 * _LANE:
        # keep >= 4 grid steps for large B so ("parallel",) can shard the grid
        # across both TensorCores on v7x (free on single-TC v5e/v6e).
        tb = min(tb, max(_LANE, (b128 // 4) // _LANE * _LANE))
    tb = min(tb, b128)

    ntiles = -(-B // tb)
    b_pad = ntiles * tb

    # x stays in its natural (B, 25) layout; only cast (no-op for f32) and a
    # tail pad when B is not a tile multiple.  (Padded rows are zeros and the
    # corresponding output columns are sliced off below.)
    xf = x.astype(jnp.float32)
    if b_pad != B:
        xf = jnp.pad(xf, ((0, b_pad - B), (0, 0)))

    out_t = pl.pallas_call(
        search_toy_kernel,
        out_shape=jax.ShapeDtypeStruct((2, b_pad), jnp.float32),
        grid=(ntiles,),
        in_specs=[
            pl.BlockSpec((4, F), lambda i: (0, 0)),      # wcat, resident
            pl.BlockSpec((2, 4), lambda i: (0, 0)),      # wcomb, resident
            pl.BlockSpec((2, 1), lambda i: (0, 0)),      # bias, resident
            pl.BlockSpec((tb, F), lambda i: (i, 0)),     # x batch tiles (natural layout)
        ],
        out_specs=pl.BlockSpec((2, tb), lambda i: (0, i)),   # lane-dense logits^T tiles
        compiler_params=pltpu.CompilerParams(
            dimension_semantics=("parallel",),           # 2-TC sharding on v7x
            vmem_limit_bytes=32 * 1024 * 1024,           # headroom on v5e default scoped VMEM
        ),
        cost_estimate=pl.CostEstimate(
            flops=2 * b_pad * F * 4 + 16 * b_pad,
            transcendentals=4 * b_pad,
            bytes_accessed=(F + 2) * 4 * b_pad,          # ~108 B per batch element
        ),
    )(wcat, wcomb, bias, xf)

    return out_t[:, :B].T                                # (B, 2)


def search_toy_ref(x, alpha, params):
    """Pure-JAX reference mirroring the PyTorch forward."""
    r1 = params["model1"]                                   # (2,)
    r2 = jnp.tanh(x[:, :1] @ params["w2"].T)                # (B, 2)
    r3 = jnp.tanh(x @ params["w3"].T)                       # (B, 2)
    comb = r1 * alpha[0] + r2 * alpha[1] + r3 * alpha[2]
    return comb @ params["wsm"].T


def init_params(key):
    """Deterministic parameter init matching the module's shapes."""
    k2, k3, ksm = jax.random.split(key, 3)
    return {
        "model1": jnp.ones((2,), jnp.float32),                           # nn.Parameter(ones(2))
        "w2": jax.random.uniform(k2, (2, 1), jnp.float32, -1.0, 1.0),    # Linear(1, 2, bias=False)
        "w3": jax.random.uniform(k3, (2, 25), jnp.float32, -0.2, 0.2),   # Linear(25, 2, bias=False)
        "wsm": jax.random.uniform(ksm, (2, 2), jnp.float32, -0.7, 0.7),  # Linear(2, 2, bias=False)
    }


if __name__ == "__main__":
    key = jax.random.PRNGKey(0)
    kp, kx, ka = jax.random.split(key, 3)

    params = init_params(kp)
    alpha = jax.nn.softmax(jax.random.normal(ka, (3,), jnp.float32))

    # Small single-tile case.
    B = 8
    x = jax.random.normal(kx, (B, _FEAT), jnp.float32)
    out = jax.block_until_ready(search_toy_forward(x, alpha, params))
    ref = search_toy_ref(x, alpha, params)
    assert out.shape == (B, 2)
    assert jnp.allclose(out, ref, atol=1e-5, rtol=1e-5), (out, ref)

    # Multi-tile grid + ragged batch tail (tb=128 -> grid=(3,)).
    B2 = 300
    x2 = jax.random.normal(kx, (B2, _FEAT), jnp.float32)
    out2 = jax.block_until_ready(search_toy_forward(x2, alpha, params, tb=128))
    ref2 = search_toy_ref(x2, alpha, params)
    assert out2.shape == (B2, 2)
    assert jnp.allclose(out2, ref2, atol=1e-5, rtol=1e-5)

    # Default (large) tile request with the >=4-grid-step v7x guard engaged.
    B3 = 600
    x3 = jax.random.normal(kx, (B3, _FEAT), jnp.float32)
    out3 = jax.block_until_ready(search_toy_forward(x3, alpha, params))
    ref3 = search_toy_ref(x3, alpha, params)
    assert out3.shape == (B3, 2)
    assert jnp.allclose(out3, ref3, atol=1e-5, rtol=1e-5)

    print("KERNEL_OK")
</pallas_src>

<mosaic_0001>
module attributes {stable_mosaic.version = 11 : i64} {
  func.func @search_toy_kernel(%arg0: i32, %arg1: memref<4x25xf32, #tpu.memory_space<vmem>>, %arg2: memref<2x4xf32, #tpu.memory_space<vmem>>, %arg3: memref<2x1xf32, #tpu.memory_space<vmem>>, %arg4: memref<128x25xf32, #tpu.memory_space<vmem>>, %arg5: memref<2x128xf32, #tpu.memory_space<vmem>>) attributes {dimension_semantics = [#tpu.dimension_semantics<parallel>], iteration_bounds = array<i64: 1>, scalar_prefetch = 0 : i64, scratch_operands = 0 : i64, tpu.core_type = #tpu.core_type<tc>, window_params = [{pipeline_mode = #tpu.pipeline_mode<synchronous>, transform_indices = @transform_0, window_bounds = array<i64: 4, 25>}, {pipeline_mode = #tpu.pipeline_mode<synchronous>, transform_indices = @transform_1, window_bounds = array<i64: 2, 4>}, {pipeline_mode = #tpu.pipeline_mode<synchronous>, transform_indices = @transform_2, window_bounds = array<i64: 2, 1>}, {transform_indices = @transform_3, window_bounds = array<i64: 128, 25>}, {transform_indices = @transform_4, window_bounds = array<i64: 2, 128>}]} {
    %c0 = arith.constant 0 : index
    %c0_0 = arith.constant 0 : index
    %0 = vector.load %arg1[%c0, %c0_0] : memref<4x25xf32, #tpu.memory_space<vmem>>, vector<4x25xf32>
    %c0_1 = arith.constant 0 : index
    %c0_2 = arith.constant 0 : index
    %1 = vector.load %arg4[%c0_1, %c0_2] : memref<128x25xf32, #tpu.memory_space<vmem>>, vector<128x25xf32>
    %cst = arith.constant dense<0.000000e+00> : vector<4x128xf32>
    %2 = tpu.matmul %0, %1, %cst {dimension_numbers = #tpu.dot_dimension_numbers<[1], [1], [0], [0], [0, 0, 1, 0], [], []>} : vector<4x25xf32>, vector<128x25xf32>, vector<4x128xf32> -> vector<4x128xf32>
    %3 = math.tanh %2 : vector<4x128xf32>
    %c0_3 = arith.constant 0 : index
    %c0_4 = arith.constant 0 : index
    %4 = vector.load %arg2[%c0_3, %c0_4] : memref<2x4xf32, #tpu.memory_space<vmem>>, vector<2x4xf32>
    %5 = vector.extract_strided_slice %4 {offsets = [0, 0], sizes = [2, 1], strides = [1, 1]} : vector<2x4xf32> to vector<2x1xf32>
    %6 = vector.extract_strided_slice %3 {offsets = [0, 0], sizes = [1, 128], strides = [1, 1]} : vector<4x128xf32> to vector<1x128xf32>
    %7 = vector.broadcast %5 : vector<2x1xf32> to vector<2x128xf32>
    %8 = vector.broadcast %6 : vector<1x128xf32> to vector<2x128xf32>
    %9 = arith.mulf %7, %8 : vector<2x128xf32>
    %10 = vector.extract_strided_slice %4 {offsets = [0, 1], sizes = [2, 1], strides = [1, 1]} : vector<2x4xf32> to vector<2x1xf32>
    %11 = vector.extract_strided_slice %3 {offsets = [1, 0], sizes = [1, 128], strides = [1, 1]} : vector<4x128xf32> to vector<1x128xf32>
    %12 = vector.broadcast %10 : vector<2x1xf32> to vector<2x128xf32>
    %13 = vector.broadcast %11 : vector<1x128xf32> to vector<2x128xf32>
    %14 = arith.mulf %12, %13 : vector<2x128xf32>
    %15 = arith.addf %9, %14 : vector<2x128xf32>
    %16 = vector.extract_strided_slice %4 {offsets = [0, 2], sizes = [2, 1], strides = [1, 1]} : vector<2x4xf32> to vector<2x1xf32>
    %17 = vector.extract_strided_slice %3 {offsets = [2, 0], sizes = [1, 128], strides = [1, 1]} : vector<4x128xf32> to vector<1x128xf32>
    %18 = vector.broadcast %16 : vector<2x1xf32> to vector<2x128xf32>
    %19 = vector.broadcast %17 : vector<1x128xf32> to vector<2x128xf32>
    %20 = arith.mulf %18, %19 : vector<2x128xf32>
    %21 = arith.addf %15, %20 : vector<2x128xf32>
    %22 = vector.extract_strided_slice %4 {offsets = [0, 3], sizes = [2, 1], strides = [1, 1]} : vector<2x4xf32> to vector<2x1xf32>
    %23 = vector.extract_strided_slice %3 {offsets = [3, 0], sizes = [1, 128], strides = [1, 1]} : vector<4x128xf32> to vector<1x128xf32>
    %24 = vector.broadcast %22 : vector<2x1xf32> to vector<2x128xf32>
    %25 = vector.broadcast %23 : vector<1x128xf32> to vector<2x128xf32>
    %26 = arith.mulf %24, %25 : vector<2x128xf32>
    %27 = arith.addf %21, %26 : vector<2x128xf32>
    %c0_5 = arith.constant 0 : index
    %c0_6 = arith.constant 0 : index
    %28 = vector.load %arg3[%c0_5, %c0_6] : memref<2x1xf32, #tpu.memory_space<vmem>>, vector<2x1xf32>
    %29 = vector.broadcast %28 : vector<2x1xf32> to vector<2x128xf32>
    %30 = arith.addf %27, %29 : vector<2x128xf32>
    %c0_7 = arith.constant 0 : index
    %c0_8 = arith.constant 0 : index
    %31 = vector.load %arg5[%c0_7, %c0_8] : memref<2x128xf32, #tpu.memory_space<vmem>>, vector<2x128xf32>
    tpu.vector_store %arg5[%c0_7, %c0_8], %30 {strides = array<i32>} : memref<2x128xf32, #tpu.memory_space<vmem>>, vector<2x128xf32>,
    return
  }
  func.func @transform_0(%arg0: i32) -> (i32, i32) {
    %c0_i32 = arith.constant 0 : i32
    %c0_i32_0 = arith.constant 0 : i32
    %c0_i32_1 = arith.constant 0 : i32
    return %c0_i32, %c0_i32_0 : i32, i32
  }
  func.func @transform_1(%arg0: i32) -> (i32, i32) {
    %c0_i32 = arith.constant 0 : i32
    %c0_i32_0 = arith.constant 0 : i32
    %c0_i32_1 = arith.constant 0 : i32
    return %c0_i32, %c0_i32_0 : i32, i32
  }
  func.func @transform_2(%arg0: i32) -> (i32, i32) {
    %c0_i32 = arith.constant 0 : i32
    %c0_i32_0 = arith.constant 0 : i32
    %c0_i32_1 = arith.constant 0 : i32
    return %c0_i32, %c0_i32_0 : i32, i32
  }
  func.func @transform_3(%arg0: i32) -> (i32, i32) {
    %c0_i32 = arith.constant 0 : i32
    %c0_i32_0 = arith.constant 0 : i32
    return %arg0, %c0_i32 : i32, i32
  }
  func.func @transform_4(%arg0: i32) -> (i32, i32) {
    %c0_i32 = arith.constant 0 : i32
    %c0_i32_0 = arith.constant 0 : i32
    return %c0_i32, %arg0 : i32, i32
  }
}

</mosaic_0001>

<llo_original>
// kernel: search_toy_forward.1
$region0: #{search_toy_forward.1}
  #allocation0 [shape = 'u32[]', space=smem, size = 0x4, offset = 0x4, fixed_abs, tag = 'smem constant byte address 0x4 - core index']
  #allocation1 [shape = 'u32[144,128]{1,0:T(1,128)}', space=vmem, size = 0x12000, scoped, tag = 'internal scratch']
  %s0 = inlined_call_operand.vmem [shape: f32[4,25], index: 0, kind: input, shape index: {}]
  %s1 = inlined_call_operand.vmem [shape: f32[2,4], index: 1, kind: input, shape index: {}]
  %s2 = inlined_call_operand.vmem [shape: f32[2,1], index: 2, kind: input, shape index: {}]
  %s3 = inlined_call_operand.vmem [shape: f32[128,25], index: 3, kind: input, shape index: {}]
  %s4 = inlined_call_operand.vmem [shape: f32[2,128], index: 4, kind: output, shape index: {}]
  %s5 = sld [smem:[#allocation0]]
  $region26: #{search_toy_forward.1} parent=0
    _
  %s7 = ssub.s32 1, %s5
  %s8 = scalar_select 0, %s7, %s5
  // Predicated region
  $region2: #{search_toy_forward.1} parent=0 // pred_check
    _
  $region3: #{search_toy_forward.1} parent=0 // pred_check_branch
    %10 = sbr.rel (0) target = $region5
  $region4: #{search_toy_forward.1} parent=0 // pred_region
    _
  $region5: #{search_toy_forward.1} parent=0 // pred_fallthru
    _
  // Predicated region
  $region6: #{search_toy_forward.1} parent=0 // pred_check
    _
  $region7: #{search_toy_forward.1} parent=0 // pred_check_branch
    %12 = sbr.rel (0) target = $region9
  $region8: #{search_toy_forward.1} parent=0 // pred_region
    _
  $region9: #{search_toy_forward.1} parent=0 // pred_fallthru
    _
  // Predicated region
  $region10: #{search_toy_forward.1} parent=0 // pred_check
    _
  $region11: #{search_toy_forward.1} parent=0 // pred_check_branch
    %14 = sbr.rel (0) target = $region13
  $region12: #{search_toy_forward.1} parent=0 // pred_region
    _
  $region13: #{search_toy_forward.1} parent=0 // pred_fallthru
    _
  // Predicated region
  $region14: #{search_toy_forward.1} parent=0 // pred_check
    _
  $region15: #{search_toy_forward.1} parent=0 // pred_check_branch
    %16 = sbr.rel (0) target = $region17
  $region16: #{search_toy_forward.1} parent=0 // pred_region
    _
  $region17: #{search_toy_forward.1} parent=0 // pred_fallthru
    _
  %v17 = vld [vmem:[%s0] sm:$0xf]
  %v18 = vld [vmem:[%s3] sm:$0xff]
  %v19 = vld [vmem:[%s3 + $0x8] sm:$0xff]
  %v20 = vld [vmem:[%s3 + $0x10] sm:$0xff]
  %v21 = vld [vmem:[%s3 + $0x18] sm:$0xff]
  %v22 = vld [vmem:[%s3 + $0x20] sm:$0xff]
  %v23 = vld [vmem:[%s3 + $0x28] sm:$0xff]
  %v24 = vld [vmem:[%s3 + $0x30] sm:$0xff]
  %v25 = vld [vmem:[%s3 + $0x38] sm:$0xff]
  %v26 = vld [vmem:[%s3 + $0x40] sm:$0xff]
  %v27 = vld [vmem:[%s3 + $0x48] sm:$0xff]
  %v28 = vld [vmem:[%s3 + $0x50] sm:$0xff]
  %v29 = vld [vmem:[%s3 + $0x58] sm:$0xff]
  %v30 = vld [vmem:[%s3 + $0x60] sm:$0xff]
  %v31 = vld [vmem:[%s3 + $0x68] sm:$0xff]
  %v32 = vld [vmem:[%s3 + $0x70] sm:$0xff]
  %v33 = vld [vmem:[%s3 + $0x78] sm:$0xff]
  %vm34 = vcmask 203776
  %v36 = vsel %vm34, %v17, 0
  %v39 = vsel %vm34, %v18, 0
  %v42 = vsel %vm34, %v19, 0
  %v45 = vsel %vm34, %v20, 0
  %v48 = vsel %vm34, %v21, 0
  %v51 = vsel %vm34, %v22, 0
  %v54 = vsel %vm34, %v23, 0
  %v57 = vsel %vm34, %v24, 0
  %v60 = vsel %vm34, %v25, 0
  %v63 = vsel %vm34, %v26, 0
  %v66 = vsel %vm34, %v27, 0
  %v69 = vsel %vm34, %v28, 0
  %v72 = vsel %vm34, %v29, 0
  %v75 = vsel %vm34, %v30, 0
  %v78 = vsel %vm34, %v31, 0
  %v81 = vsel %vm34, %v32, 0
  %v84 = vsel %vm34, %v33, 0
  %86 = vmatprep.subr.mxu0 0.0
  %87 = vmatpush1.xpose.msra.mxu0 %v84
  %88 = vmatprep.subr.mxu0 0.0
  %89 = vmatpush1.xpose.msra.mxu0 %v81
  %90 = vmatprep.subr.mxu0 0.0
  %91 = vmatpush1.xpose.msra.mxu0 %v78
  %92 = vmatprep.subr.mxu0 0.0
  %93 = vmatpush1.xpose.msra.mxu0 %v75
  %94 = vmatprep.subr.mxu0 0.0
  %95 = vmatpush1.xpose.msra.mxu0 %v72
  %96 = vmatprep.subr.mxu0 0.0
  %97 = vmatpush1.xpose.msra.mxu0 %v69
  %98 = vmatprep.subr.mxu0 0.0
  %99 = vmatpush1.xpose.msra.mxu0 %v66
  %100 = vmatprep.subr.mxu0 0.0
  %101 = vmatpush1.xpose.msra.mxu0 %v63
  %102 = vmatprep.subr.mxu0 0.0
  %103 = vmatpush1.xpose.msra.mxu0 %v60
  %104 = vmatprep.subr.mxu0 0.0
  %105 = vmatpush1.xpose.msra.mxu0 %v57
  %106 = vmatprep.subr.mxu0 0.0
  %107 = vmatpush1.xpose.msra.mxu0 %v54
  %108 = vmatprep.subr.mxu0 0.0
  %109 = vmatpush1.xpose.msra.mxu0 %v51
  %110 = vmatprep.subr.mxu0 0.0
  %111 = vmatpush1.xpose.msra.mxu0 %v48
  %112 = vmatprep.subr.mxu0 0.0
  %113 = vmatpush1.xpose.msra.mxu0 %v45
  %114 = vmatprep.subr.mxu0 0.0
  %115 = vmatpush1.xpose.msra.mxu0 %v42
  %116 = vmatprep.subr.mxu0 0.0
  %117 = vmatpush1.xpose.msra.mxu0 %v39
  %118 = vmatprep.subr.mxu0 0.0
  %119 = vmatpush2.xpose.msra.mxu0 0.0
  %120 = vmatprep.subr.mxu0 0.0
  %121 = vmatpush2.xpose.msra.mxu0 0.0
  %122 = vmatprep.subr.mxu0 0.0
  %123 = vmatpush2.xpose.msra.mxu0 0.0
  %124 = vmatprep.subr.mxu0 0.0
  %125 = vmatpush2.xpose.msra.mxu0 0.0
  %126 = vmatprep.subr.mxu0 0.0
  %127 = vmatpush2.xpose.msra.mxu0 0.0
  %128 = vmatprep.subr.mxu0 0.0
  %129 = vmatpush2.xpose.msra.mxu0 0.0
  %130 = vmatprep.subr.mxu0 0.0
  %131 = vmatpush2.xpose.msra.mxu0 0.0
  %132 = vmatprep.subr.mxu0 0.0
  %133 = vmatpush2.xpose.msra.mxu0 0.0
  %134 = vmatprep.subr.mxu0 0.0
  %135 = vmatpush2.xpose.msra.mxu0 0.0
  %136 = vmatprep.subr.mxu0 0.0
  %137 = vmatpush2.xpose.msra.mxu0 0.0
  %138 = vmatprep.subr.mxu0 0.0
  %139 = vmatpush2.xpose.msra.mxu0 0.0
  %140 = vmatprep.subr.mxu0 0.0
  %141 = vmatpush2.xpose.msra.mxu0 0.0
  %142 = vmatprep.subr.mxu0 0.0
  %143 = vmatpush2.xpose.msra.mxu0 0.0
  %144 = vmatprep.subr.mxu0 0.0
  %145 = vmatpush2.xpose.msra.mxu0 0.0
  %146 = vmatprep.subr.mxu0 0.0
  %147 = vmatpush2.xpose.msra.mxu0 0.0
  %148 = vmatprep.subr.mxu0 0.0
  %149 = vmatpush2.xpose.msra.mxu0 0.0
  %150 = vmatprep.mubr.f32.mxu0 0.0
  %151 = vmatmul.mubr.f32.gmra.mxu0 %v36
  %v152 = vpop.f32.mrf.mxu0
  %v153 = vadd.f32 0.0, %v152
  %v154 = vpop.f32.mrf.mxu0
  %155 = vdwg.mxu0
  %v156 = vtanh.pop %v153
  %v157 = vld [vmem:[%s1] sm:$0x3]
  %159 = vset.pattern.permute.xlu0 0
  %160 = vperm.xlu0 %159, %v157
  %v161 = vpop.permute.xlu0 %160
  %v163 = vlaneseq
  %v164 = vshrl.u32 %v163, 7
  %v165 = vsub.s32 0, %v164
  %v166 = vrot.slane %v156, %v165
  %v167 = vmul.f32 %v161, %v166
  %168 = vset.pattern.permute.xlu0 1
  %169 = vperm.xlu0 %168, %v157
  %v170 = vpop.permute.xlu0 %169
  %v172 = vlaneseq
  %v173 = vshrl.u32 %v172, 7
  %v174 = vsub.s32 1, %v173
  %v175 = vrot.slane %v156, %v174
  %v176 = vmul.f32 %v170, %v175
  %v177 = vadd.f32 %v167, %v176
  %178 = vset.pattern.permute.xlu0 2
  %179 = vperm.xlu0 %178, %v157
  %v180 = vpop.permute.xlu0 %179
  %v182 = vlaneseq
  %v183 = vshrl.u32 %v182, 7
  %v184 = vsub.s32 2, %v183
  %v185 = vrot.slane %v156, %v184
  %v186 = vmul.f32 %v180, %v185
  %v187 = vadd.f32 %v177, %v186
  %188 = vset.pattern.permute.xlu0 3
  %189 = vperm.xlu0 %188, %v157
  %v190 = vpop.permute.xlu0 %189
  %v192 = vlaneseq
  %v193 = vshrl.u32 %v192, 7
  %v194 = vsub.s32 3, %v193
  %v195 = vrot.slane %v156, %v194
  %v196 = vmul.f32 %v190, %v195
  %v197 = vadd.f32 %v187, %v196
  %v198 = vld [vmem:[%s2] sm:$0x3]
  %200 = vset.pattern.permute.xlu0 0
  %201 = vperm.xlu0 %200, %v198
  %v202 = vpop.permute.xlu0 %201
  %v204 = vadd.f32 %v197, %v202
  %205 = vst [vmem:[%s4] sm:$0x3] %v204
  // Predicated region
  $region18: #{search_toy_forward.1} parent=0 // pred_check
    _
  $region19: #{search_toy_forward.1} parent=0 // pred_check_branch
    %207 = sbr.rel (0) target = $region21
  $region20: #{search_toy_forward.1} parent=0 // pred_region
    _
  $region21: #{search_toy_forward.1} parent=0 // pred_fallthru
    _
  // Predicated region
  $region22: #{search_toy_forward.1} parent=0 // pred_check
    _
  $region23: #{search_toy_forward.1} parent=0 // pred_check_branch
    %209 = sbr.rel (0) target = $region25
  $region24: #{search_toy_forward.1} parent=0 // pred_region
    _
  $region25: #{search_toy_forward.1} parent=0 // pred_fallthru
    _

</llo_original>
